<compile_context>
chip_gen: v6e
topology: v6e:2x2x1
jax: 0.10.0
libtpu: 0.0.40
codegen_flags: <defaults>
</compile_context>

<pallas_src>
import functools

import jax
import jax.numpy as jnp
from jax import lax
from jax.experimental import pallas as pl
from jax.experimental.pallas import tpu as pltpu


def _mrcb_kernel(x_ref, w_in_ref, b_in_ref, w_out_ref, b_out_ref, out_ref,
                 *, C, W, seg, sizes):
    """Fused MRCB forward on one packed (H, L) slab, L = C * seg, seg = Bg * W.

    Lane layout (channel-major): lane l = c*seg + b*W + w.
    """
    H, L = x_ref.shape
    x = x_ref[...]                                   # (H, L) identity / conv_in input

    # ---- hoisted validity masks (shared by all channels and all scales) ----
    max_p = sizes[-1] // 2
    row_ids = lax.broadcasted_iota(jnp.int32, (H, L), 0)
    col_ids = lax.broadcasted_iota(jnp.int32, (H, L), 1) % W   # w index inside its plane
    row_ok = {}
    col_ok = {}
    for d in range(-max_p, max_p + 1):
        if d == 0:
            continue
        row_ok[d] = jnp.logical_and(row_ids >= -d, row_ids < H - d)
        col_ok[d] = jnp.logical_and(col_ids >= -d, col_ids < W - d)
    neg_inf = jnp.float32(-jnp.inf)

    # ---- conv_in (1x1): channel mixing via lane rolls of the packed slab ----
    # roll by delta*seg brings channel (c+delta) % C of the SAME (b, w) to the
    # lanes of channel c (channel-major packing => circular wrap == mod-C wrap).
    gx = x * w_in_ref[0] + b_in_ref[...]
    for delta in range(1, C):
        v = pltpu.roll(x, shift=(-delta * seg) % L, axis=1)
        gx = gx + v * w_in_ref[delta]

    # ---- output accumulator: identity + conv_1x1 bias ------------------------
    out = x + b_out_ref[...]

    # ---- multi-scale fusion pooling (incremental row pass) + streamed conv --
    # max pool pads with -inf; avg pool pads with 0 and divides by k*k
    # (PyTorch AvgPool2d default count_include_pad=True).
    rsum = gx          # d = 0 tap (always valid)
    rmax = gx
    cur_p = 0
    for si, k in enumerate(sizes):
        p = k // 2
        # Extend the shared row pass by the new taps only (7 taps total, not 15).
        for d in range(cur_p + 1, p + 1):
            for dd in (d, -d):
                v = pltpu.roll(gx, shift=(-dd) % H, axis=0)
                rsum = rsum + jnp.where(row_ok[dd], v, 0.0)
                rmax = jnp.maximum(rmax, jnp.where(row_ok[dd], v, neg_inf))
        cur_p = p

        # Column pass for this scale (lane rolls; cross-plane leakage is masked).
        csum = rsum
        cmax = rmax
        for d in range(1, p + 1):
            for dd in (d, -d):
                vs = pltpu.roll(rsum, shift=(-dd) % L, axis=1)
                csum = csum + jnp.where(col_ok[dd], vs, 0.0)
                vm = pltpu.roll(rmax, shift=(-dd) % L, axis=1)
                cmax = jnp.maximum(cmax, jnp.where(col_ok[dd], vm, neg_inf))

        fused = cmax + csum * (1.0 / float(k * k))   # maxpool_k + avgpool_k

        # Streaming conv_1x1 accumulation: consume `fused` immediately.
        out = out + fused * w_out_ref[si * C + 0]
        for delta in range(1, C):
            v = pltpu.roll(fused, shift=(-delta * seg) % L, axis=1)
            out = out + v * w_out_ref[si * C + delta]

    out_ref[...] = out


def _pick_num_shards(B):
    """Generation-conditional grid: 2-way parallel batch split on v7x (2 TCs),
    single grid step on single-TC v5e/v6e (or unknown backends)."""
    try:
        kind = jax.devices()[0].device_kind.lower()
    except Exception:  # pragma: no cover - defensive
        kind = ""
    want = 2 if "v7" in kind else 1
    while want > 1 and B % want != 0:
        want -= 1
    return want


def mrcb_forward(x, params, multi_size=(3, 5, 7), num_shards=None):
    """x: (B, C, H, W) float32, NCHW like the PyTorch module."""
    x = x.astype(jnp.float32)
    B, C, H, W = x.shape

    # Sort scales ascending (needed for the incremental row pass) but keep the
    # original position for the conv_1x1 weight slice (PyTorch concat order).
    order = sorted(range(len(multi_size)), key=lambda i: multi_size[i])
    sizes = tuple(int(multi_size[i]) for i in order)
    assert all(k % 2 == 1 for k in sizes), "stride-1 'same' pooling needs odd sizes"
    S = len(sizes)

    G = _pick_num_shards(B) if num_shards is None else int(num_shards)
    if G < 1 or B % G != 0:
        G = 1
    Bg = B // G
    seg = Bg * W
    L = C * seg

    # ---- lane-dense packing: (B,C,H,W) -> (G, H, C*Bg*W), channel-major lanes
    xp = x.reshape(G, Bg, C, H, W).transpose(0, 3, 2, 1, 4).reshape(G, H, L)

    # ---- per-lane weight / bias vectors for the two 1x1 convs ---------------
    w_in = params["w_in"].astype(jnp.float32)        # (C, C)
    b_in = params["b_in"].astype(jnp.float32)        # (C,)
    w_out = params["w_out"].astype(jnp.float32)      # (C, S*C)
    b_out = params["b_out"].astype(jnp.float32)      # (C,)

    c = jnp.arange(C)
    rot = (c[None, :] + c[:, None]) % C              # [delta, c_out] -> c_in
    # w_in_lanes[delta, lane(c,b,w)] = w_in[c, (c+delta) % C]
    w_in_lanes = jnp.repeat(w_in[c[None, :], rot], seg, axis=1).reshape(C, 1, L)
    w_out_rows = []
    for si in range(S):
        s_orig = order[si]
        # w_out_lanes[si*C+delta, lane(c,..)] = w_out[c, s_orig*C + (c+delta)%C]
        w_out_rows.append(jnp.repeat(w_out[c[None, :], s_orig * C + rot], seg, axis=1))
    w_out_lanes = jnp.concatenate(w_out_rows, axis=0).reshape(S * C, 1, L)
    b_in_lanes = jnp.repeat(b_in, seg).reshape(1, L)
    b_out_lanes = jnp.repeat(b_out, seg).reshape(1, L)

    kernel = functools.partial(_mrcb_kernel, C=C, W=W, seg=seg, sizes=sizes)

    out_packed = pl.pallas_call(
        kernel,
        out_shape=jax.ShapeDtypeStruct((G, H, L), jnp.float32),
        grid_spec=pltpu.PrefetchScalarGridSpec(
            num_scalar_prefetch=0,
            grid=(G,),
            in_specs=[
                pl.BlockSpec((None, H, L), lambda g: (g, 0, 0)),       # packed x
                pl.BlockSpec((C, 1, L), lambda g: (0, 0, 0)),          # w_in lanes
                pl.BlockSpec((1, L), lambda g: (0, 0)),                # b_in lanes
                pl.BlockSpec((S * C, 1, L), lambda g: (0, 0, 0)),      # w_out lanes
                pl.BlockSpec((1, L), lambda g: (0, 0)),                # b_out lanes
            ],
            out_specs=pl.BlockSpec((None, H, L), lambda g: (g, 0, 0)),
        ),
        compiler_params=pltpu.CompilerParams(
            dimension_semantics=("parallel",)),
    )(xp, w_in_lanes, b_in_lanes, w_out_lanes, b_out_lanes)

    # Unpack (G, H, L) -> (B, C, H, W).
    return (out_packed.reshape(G, H, C, Bg, W)
            .transpose(0, 3, 2, 1, 4)
            .reshape(B, C, H, W))


# ---------------------------------------------------------------------------
# Pure-JAX reference (for correctness checking only)
# ---------------------------------------------------------------------------
def mrcb_reference(x, params, multi_size=(3, 5, 7)):
    w_in, b_in = params["w_in"], params["b_in"]
    w_out, b_out = params["w_out"], params["b_out"]
    gx = jnp.einsum("oc,bchw->bohw", w_in, x) + b_in[None, :, None, None]
    feats = []
    for k in multi_size:
        p = k // 2
        pads = ((0, 0), (0, 0), (p, p), (p, p))
        mx = lax.reduce_window(gx, -jnp.inf, lax.max,
                               (1, 1, k, k), (1, 1, 1, 1), pads)
        sm = lax.reduce_window(gx, 0.0, lax.add,
                               (1, 1, k, k), (1, 1, 1, 1), pads)
        feats.append(mx + sm / float(k * k))
    cat = jnp.concatenate(feats, axis=1)
    out = jnp.einsum("oc,bchw->bohw", w_out, cat) + b_out[None, :, None, None]
    return out + x


def init_params(key, in_channels, num_scales=3):
    C = in_channels
    k1, k2, k3, k4 = jax.random.split(key, 4)
    return {
        # conv_in: Conv2d(C, C, 1) -> weight (C, C), bias (C,)
        "w_in": 0.2 * jax.random.normal(k1, (C, C), jnp.float32),
        "b_in": 0.1 * jax.random.normal(k2, (C,), jnp.float32),
        # conv_1x1: Conv2d(3C, C, 1) -> weight (C, 3C), bias (C,)
        "w_out": 0.2 * jax.random.normal(k3, (C, C * num_scales), jnp.float32),
        "b_out": 0.1 * jax.random.normal(k4, (C,), jnp.float32),
    }


if __name__ == "__main__":
    B, C, H, W = 2, 4, 16, 16
    key = jax.random.PRNGKey(0)
    kx, kp = jax.random.split(key)
    x = jax.random.normal(kx, (B, C, H, W), jnp.float32)
    params = init_params(kp, C)

    out = jax.jit(mrcb_forward)(x, params)
    jax.block_until_ready(out)
    assert out.shape == (B, C, H, W), out.shape

    ref = mrcb_reference(x, params)
    err = float(jnp.max(jnp.abs(out - ref)))
    assert err < 1e-3, f"max abs err vs reference = {err}"
    print("KERNEL_OK")
</pallas_src>

<mosaic_0001>
module attributes {stable_mosaic.version = 11 : i64} {
  func.func @_mrcb_kernel(%arg0: i32, %arg1: memref<1x16x128xf32, #tpu.memory_space<vmem>>, %arg2: memref<4x1x128xf32, #tpu.memory_space<vmem>>, %arg3: memref<1x128xf32, #tpu.memory_space<vmem>>, %arg4: memref<12x1x128xf32, #tpu.memory_space<vmem>>, %arg5: memref<1x128xf32, #tpu.memory_space<vmem>>, %arg6: memref<1x16x128xf32, #tpu.memory_space<vmem>>) attributes {dimension_semantics = [#tpu.dimension_semantics<parallel>], iteration_bounds = array<i64: 1>, scalar_prefetch = 0 : i64, scratch_operands = 0 : i64, tpu.core_type = #tpu.core_type<tc>, window_params = [{transform_indices = @transform_0, window_bounds = array<i64: 1, 16, 128>}, {pipeline_mode = #tpu.pipeline_mode<synchronous>, transform_indices = @transform_1, window_bounds = array<i64: 4, 1, 128>}, {pipeline_mode = #tpu.pipeline_mode<synchronous>, transform_indices = @transform_2, window_bounds = array<i64: 1, 128>}, {pipeline_mode = #tpu.pipeline_mode<synchronous>, transform_indices = @transform_3, window_bounds = array<i64: 12, 1, 128>}, {pipeline_mode = #tpu.pipeline_mode<synchronous>, transform_indices = @transform_4, window_bounds = array<i64: 1, 128>}, {transform_indices = @transform_5, window_bounds = array<i64: 1, 16, 128>}]} {
    %c0 = arith.constant 0 : index
    %c0_0 = arith.constant 0 : index
    %c0_1 = arith.constant 0 : index
    %0 = vector.load %arg1[%c0, %c0_0, %c0_1] : memref<1x16x128xf32, #tpu.memory_space<vmem>>, vector<1x16x128xf32>
    %1 = vector.shape_cast %0 : vector<1x16x128xf32> to vector<16x128xf32>
    %2 = tpu.iota {dimensions = array<i32: 0>} : vector<16x128xi32>
    %3 = tpu.iota {dimensions = array<i32: 1>} : vector<16x128xi32>
    %c16_i32 = arith.constant 16 : i32
    %c0_i32 = arith.constant 0 : i32
    %4 = arith.cmpi eq, %c16_i32, %c0_i32 : i32
    %c1_i32 = arith.constant 1 : i32
    %5 = arith.select %4, %c1_i32, %c16_i32 : i32
    %6 = vector.broadcast %5 : i32 to vector<16x128xi32>
    %7 = arith.remsi %3, %6 : vector<16x128xi32>
    %c0_i32_2 = arith.constant 0 : i32
    %8 = vector.broadcast %c0_i32_2 : i32 to vector<16x128xi32>
    %9 = arith.cmpi ne, %7, %8 : vector<16x128xi32>
    %c0_i32_3 = arith.constant 0 : i32
    %10 = vector.broadcast %c0_i32_3 : i32 to vector<16x128xi32>
    %11 = arith.cmpi slt, %7, %10 : vector<16x128xi32>
    %c0_i32_4 = arith.constant 0 : i32
    %12 = arith.cmpi slt, %5, %c0_i32_4 : i32
    %13 = vector.broadcast %12 : i1 to vector<16x128xi1>
    %14 = vector.broadcast %13 : vector<16x128xi1> to vector<16x128xi1>
    %15 = arith.xori %11, %14 : vector<16x128xi1>
    %16 = arith.andi %15, %9 : vector<16x128xi1>
    %17 = vector.broadcast %5 : i32 to vector<16x128xi32>
    %18 = arith.addi %7, %17 : vector<16x128xi32>
    %19 = arith.select %16, %18, %7 : vector<16x128xi1>, vector<16x128xi32>
    %c3_i32 = arith.constant 3 : i32
    %20 = vector.broadcast %c3_i32 : i32 to vector<16x128xi32>
    %21 = arith.cmpi sge, %2, %20 : vector<16x128xi32>
    %c19_i32 = arith.constant 19 : i32
    %22 = vector.broadcast %c19_i32 : i32 to vector<16x128xi32>
    %23 = arith.cmpi slt, %2, %22 : vector<16x128xi32>
    %24 = arith.andi %21, %23 : vector<16x128xi1>
    %c3_i32_5 = arith.constant 3 : i32
    %25 = vector.broadcast %c3_i32_5 : i32 to vector<16x128xi32>
    %26 = arith.cmpi sge, %19, %25 : vector<16x128xi32>
    %c19_i32_6 = arith.constant 19 : i32
    %27 = vector.broadcast %c19_i32_6 : i32 to vector<16x128xi32>
    %28 = arith.cmpi slt, %19, %27 : vector<16x128xi32>
    %29 = arith.andi %26, %28 : vector<16x128xi1>
    %c2_i32 = arith.constant 2 : i32
    %30 = vector.broadcast %c2_i32 : i32 to vector<16x128xi32>
    %31 = arith.cmpi sge, %2, %30 : vector<16x128xi32>
    %c18_i32 = arith.constant 18 : i32
    %32 = vector.broadcast %c18_i32 : i32 to vector<16x128xi32>
    %33 = arith.cmpi slt, %2, %32 : vector<16x128xi32>
    %34 = arith.andi %31, %33 : vector<16x128xi1>
    %c2_i32_7 = arith.constant 2 : i32
    %35 = vector.broadcast %c2_i32_7 : i32 to vector<16x128xi32>
    %36 = arith.cmpi sge, %19, %35 : vector<16x128xi32>
    %c18_i32_8 = arith.constant 18 : i32
    %37 = vector.broadcast %c18_i32_8 : i32 to vector<16x128xi32>
    %38 = arith.cmpi slt, %19, %37 : vector<16x128xi32>
    %39 = arith.andi %36, %38 : vector<16x128xi1>
    %c1_i32_9 = arith.constant 1 : i32
    %40 = vector.broadcast %c1_i32_9 : i32 to vector<16x128xi32>
    %41 = arith.cmpi sge, %2, %40 : vector<16x128xi32>
    %c17_i32 = arith.constant 17 : i32
    %42 = vector.broadcast %c17_i32 : i32 to vector<16x128xi32>
    %43 = arith.cmpi slt, %2, %42 : vector<16x128xi32>
    %44 = arith.andi %41, %43 : vector<16x128xi1>
    %c1_i32_10 = arith.constant 1 : i32
    %45 = vector.broadcast %c1_i32_10 : i32 to vector<16x128xi32>
    %46 = arith.cmpi sge, %19, %45 : vector<16x128xi32>
    %c17_i32_11 = arith.constant 17 : i32
    %47 = vector.broadcast %c17_i32_11 : i32 to vector<16x128xi32>
    %48 = arith.cmpi slt, %19, %47 : vector<16x128xi32>
    %49 = arith.andi %46, %48 : vector<16x128xi1>
    %c-1_i32 = arith.constant -1 : i32
    %50 = vector.broadcast %c-1_i32 : i32 to vector<16x128xi32>
    %51 = arith.cmpi sge, %2, %50 : vector<16x128xi32>
    %c15_i32 = arith.constant 15 : i32
    %52 = vector.broadcast %c15_i32 : i32 to vector<16x128xi32>
    %53 = arith.cmpi slt, %2, %52 : vector<16x128xi32>
    %54 = arith.andi %51, %53 : vector<16x128xi1>
    %c-1_i32_12 = arith.constant -1 : i32
    %55 = vector.broadcast %c-1_i32_12 : i32 to vector<16x128xi32>
    %56 = arith.cmpi sge, %19, %55 : vector<16x128xi32>
    %c15_i32_13 = arith.constant 15 : i32
    %57 = vector.broadcast %c15_i32_13 : i32 to vector<16x128xi32>
    %58 = arith.cmpi slt, %19, %57 : vector<16x128xi32>
    %59 = arith.andi %56, %58 : vector<16x128xi1>
    %c-2_i32 = arith.constant -2 : i32
    %60 = vector.broadcast %c-2_i32 : i32 to vector<16x128xi32>
    %61 = arith.cmpi sge, %2, %60 : vector<16x128xi32>
    %c14_i32 = arith.constant 14 : i32
    %62 = vector.broadcast %c14_i32 : i32 to vector<16x128xi32>
    %63 = arith.cmpi slt, %2, %62 : vector<16x128xi32>
    %64 = arith.andi %61, %63 : vector<16x128xi1>
    %c-2_i32_14 = arith.constant -2 : i32
    %65 = vector.broadcast %c-2_i32_14 : i32 to vector<16x128xi32>
    %66 = arith.cmpi sge, %19, %65 : vector<16x128xi32>
    %c14_i32_15 = arith.constant 14 : i32
    %67 = vector.broadcast %c14_i32_15 : i32 to vector<16x128xi32>
    %68 = arith.cmpi slt, %19, %67 : vector<16x128xi32>
    %69 = arith.andi %66, %68 : vector<16x128xi1>
    %c-3_i32 = arith.constant -3 : i32
    %70 = vector.broadcast %c-3_i32 : i32 to vector<16x128xi32>
    %71 = arith.cmpi sge, %2, %70 : vector<16x128xi32>
    %c13_i32 = arith.constant 13 : i32
    %72 = vector.broadcast %c13_i32 : i32 to vector<16x128xi32>
    %73 = arith.cmpi slt, %2, %72 : vector<16x128xi32>
    %74 = arith.andi %71, %73 : vector<16x128xi1>
    %c-3_i32_16 = arith.constant -3 : i32
    %75 = vector.broadcast %c-3_i32_16 : i32 to vector<16x128xi32>
    %76 = arith.cmpi sge, %19, %75 : vector<16x128xi32>
    %c13_i32_17 = arith.constant 13 : i32
    %77 = vector.broadcast %c13_i32_17 : i32 to vector<16x128xi32>
    %78 = arith.cmpi slt, %19, %77 : vector<16x128xi32>
    %79 = arith.andi %76, %78 : vector<16x128xi1>
    %c0_18 = arith.constant 0 : index
    %c0_19 = arith.constant 0 : index
    %c0_20 = arith.constant 0 : index
    %80 = vector.load %arg2[%c0_18, %c0_19, %c0_20] : memref<4x1x128xf32, #tpu.memory_space<vmem>>, vector<1x1x128xf32>
    %81 = vector.shape_cast %80 : vector<1x1x128xf32> to vector<1x128xf32>
    %82 = vector.broadcast %81 : vector<1x128xf32> to vector<16x128xf32>
    %83 = arith.mulf %1, %82 : vector<16x128xf32>
    %c0_21 = arith.constant 0 : index
    %c0_22 = arith.constant 0 : index
    %84 = vector.load %arg3[%c0_21, %c0_22] : memref<1x128xf32, #tpu.memory_space<vmem>>, vector<1x128xf32>
    %85 = vector.broadcast %84 : vector<1x128xf32> to vector<16x128xf32>
    %86 = arith.addf %83, %85 : vector<16x128xf32>
    %c96_i32 = arith.constant 96 : i32
    %87 = tpu.dynamic_rotate %1 by %c96_i32 dim 1 : vector<16x128xf32>, i32 -> vector<16x128xf32>
    %c1 = arith.constant 1 : index
    %c0_23 = arith.constant 0 : index
    %c0_24 = arith.constant 0 : index
    %88 = vector.load %arg2[%c1, %c0_23, %c0_24] : memref<4x1x128xf32, #tpu.memory_space<vmem>>, vector<1x1x128xf32>
    %89 = vector.shape_cast %88 : vector<1x1x128xf32> to vector<1x128xf32>
    %90 = vector.broadcast %89 : vector<1x128xf32> to vector<16x128xf32>
    %91 = arith.mulf %87, %90 : vector<16x128xf32>
    %92 = arith.addf %86, %91 : vector<16x128xf32>
    %c64_i32 = arith.constant 64 : i32
    %93 = tpu.dynamic_rotate %1 by %c64_i32 dim 1 : vector<16x128xf32>, i32 -> vector<16x128xf32>
    %c2 = arith.constant 2 : index
    %c0_25 = arith.constant 0 : index
    %c0_26 = arith.constant 0 : index
    %94 = vector.load %arg2[%c2, %c0_25, %c0_26] : memref<4x1x128xf32, #tpu.memory_space<vmem>>, vector<1x1x128xf32>
    %95 = vector.shape_cast %94 : vector<1x1x128xf32> to vector<1x128xf32>
    %96 = vector.broadcast %95 : vector<1x128xf32> to vector<16x128xf32>
    %97 = arith.mulf %93, %96 : vector<16x128xf32>
    %98 = arith.addf %92, %97 : vector<16x128xf32>
    %c32_i32 = arith.constant 32 : i32
    %99 = tpu.dynamic_rotate %1 by %c32_i32 dim 1 : vector<16x128xf32>, i32 -> vector<16x128xf32>
    %c3 = arith.constant 3 : index
    %c0_27 = arith.constant 0 : index
    %c0_28 = arith.constant 0 : index
    %100 = vector.load %arg2[%c3, %c0_27, %c0_28] : memref<4x1x128xf32, #tpu.memory_space<vmem>>, vector<1x1x128xf32>
    %101 = vector.shape_cast %100 : vector<1x1x128xf32> to vector<1x128xf32>
    %102 = vector.broadcast %101 : vector<1x128xf32> to vector<16x128xf32>
    %103 = arith.mulf %99, %102 : vector<16x128xf32>
    %104 = arith.addf %98, %103 : vector<16x128xf32>
    %c0_29 = arith.constant 0 : index
    %c0_30 = arith.constant 0 : index
    %105 = vector.load %arg5[%c0_29, %c0_30] : memref<1x128xf32, #tpu.memory_space<vmem>>, vector<1x128xf32>
    %106 = vector.broadcast %105 : vector<1x128xf32> to vector<16x128xf32>
    %107 = arith.addf %1, %106 : vector<16x128xf32>
    %c15_i32_31 = arith.constant 15 : i32
    %108 = tpu.dynamic_rotate %104 by %c15_i32_31 dim 0 : vector<16x128xf32>, i32 -> vector<16x128xf32>
    %cst = arith.constant 0.000000e+00 : f32
    %109 = vector.broadcast %cst : f32 to vector<16x128xf32>
    %110 = arith.select %54, %108, %109 : vector<16x128xi1>, vector<16x128xf32>
    %111 = arith.addf %104, %110 : vector<16x128xf32>
    %cst_32 = arith.constant 0xFF800000 : f32
    %112 = vector.broadcast %cst_32 : f32 to vector<16x128xf32>
    %113 = arith.select %54, %108, %112 : vector<16x128xi1>, vector<16x128xf32>
    %114 = arith.maximumf %104, %113 : vector<16x128xf32>
    %c1_i32_33 = arith.constant 1 : i32
    %115 = tpu.dynamic_rotate %104 by %c1_i32_33 dim 0 : vector<16x128xf32>, i32 -> vector<16x128xf32>
    %cst_34 = arith.constant 0.000000e+00 : f32
    %116 = vector.broadcast %cst_34 : f32 to vector<16x128xf32>
    %117 = arith.select %44, %115, %116 : vector<16x128xi1>, vector<16x128xf32>
    %118 = arith.addf %111, %117 : vector<16x128xf32>
    %cst_35 = arith.constant 0xFF800000 : f32
    %119 = vector.broadcast %cst_35 : f32 to vector<16x128xf32>
    %120 = arith.select %44, %115, %119 : vector<16x128xi1>, vector<16x128xf32>
    %121 = arith.maximumf %114, %120 : vector<16x128xf32>
    %c127_i32 = arith.constant 127 : i32
    %122 = tpu.dynamic_rotate %118 by %c127_i32 dim 1 : vector<16x128xf32>, i32 -> vector<16x128xf32>
    %cst_36 = arith.constant 0.000000e+00 : f32
    %123 = vector.broadcast %cst_36 : f32 to vector<16x128xf32>
    %124 = arith.select %59, %122, %123 : vector<16x128xi1>, vector<16x128xf32>
    %125 = arith.addf %118, %124 : vector<16x128xf32>
    %c127_i32_37 = arith.constant 127 : i32
    %126 = tpu.dynamic_rotate %121 by %c127_i32_37 dim 1 : vector<16x128xf32>, i32 -> vector<16x128xf32>
    %cst_38 = arith.constant 0xFF800000 : f32
    %127 = vector.broadcast %cst_38 : f32 to vector<16x128xf32>
    %128 = arith.select %59, %126, %127 : vector<16x128xi1>, vector<16x128xf32>
    %129 = arith.maximumf %121, %128 : vector<16x128xf32>
    %c1_i32_39 = arith.constant 1 : i32
    %130 = tpu.dynamic_rotate %118 by %c1_i32_39 dim 1 : vector<16x128xf32>, i32 -> vector<16x128xf32>
    %cst_40 = arith.constant 0.000000e+00 : f32
    %131 = vector.broadcast %cst_40 : f32 to vector<16x128xf32>
    %132 = arith.select %49, %130, %131 : vector<16x128xi1>, vector<16x128xf32>
    %133 = arith.addf %125, %132 : vector<16x128xf32>
    %c1_i32_41 = arith.constant 1 : i32
    %134 = tpu.dynamic_rotate %121 by %c1_i32_41 dim 1 : vector<16x128xf32>, i32 -> vector<16x128xf32>
    %cst_42 = arith.constant 0xFF800000 : f32
    %135 = vector.broadcast %cst_42 : f32 to vector<16x128xf32>
    %136 = arith.select %49, %134, %135 : vector<16x128xi1>, vector<16x128xf32>
    %137 = arith.maximumf %129, %136 : vector<16x128xf32>
    %cst_43 = arith.constant 0.111111112 : f32
    %138 = vector.broadcast %cst_43 : f32 to vector<16x128xf32>
    %139 = arith.mulf %133, %138 : vector<16x128xf32>
    %140 = arith.addf %137, %139 : vector<16x128xf32>
    %c0_44 = arith.constant 0 : index
    %c0_45 = arith.constant 0 : index
    %c0_46 = arith.constant 0 : index
    %141 = vector.load %arg4[%c0_44, %c0_45, %c0_46] : memref<12x1x128xf32, #tpu.memory_space<vmem>>, vector<1x1x128xf32>
    %142 = vector.shape_cast %141 : vector<1x1x128xf32> to vector<1x128xf32>
    %143 = vector.broadcast %142 : vector<1x128xf32> to vector<16x128xf32>
    %144 = arith.mulf %140, %143 : vector<16x128xf32>
    %145 = arith.addf %107, %144 : vector<16x128xf32>
    %c96_i32_47 = arith.constant 96 : i32
    %146 = tpu.dynamic_rotate %140 by %c96_i32_47 dim 1 : vector<16x128xf32>, i32 -> vector<16x128xf32>
    %c1_48 = arith.constant 1 : index
    %c0_49 = arith.constant 0 : index
    %c0_50 = arith.constant 0 : index
    %147 = vector.load %arg4[%c1_48, %c0_49, %c0_50] : memref<12x1x128xf32, #tpu.memory_space<vmem>>, vector<1x1x128xf32>
    %148 = vector.shape_cast %147 : vector<1x1x128xf32> to vector<1x128xf32>
    %149 = vector.broadcast %148 : vector<1x128xf32> to vector<16x128xf32>
    %150 = arith.mulf %146, %149 : vector<16x128xf32>
    %151 = arith.addf %145, %150 : vector<16x128xf32>
    %c64_i32_51 = arith.constant 64 : i32
    %152 = tpu.dynamic_rotate %140 by %c64_i32_51 dim 1 : vector<16x128xf32>, i32 -> vector<16x128xf32>
    %c2_52 = arith.constant 2 : index
    %c0_53 = arith.constant 0 : index
    %c0_54 = arith.constant 0 : index
    %153 = vector.load %arg4[%c2_52, %c0_53, %c0_54] : memref<12x1x128xf32, #tpu.memory_space<vmem>>, vector<1x1x128xf32>
    %154 = vector.shape_cast %153 : vector<1x1x128xf32> to vector<1x128xf32>
    %155 = vector.broadcast %154 : vector<1x128xf32> to vector<16x128xf32>
    %156 = arith.mulf %152, %155 : vector<16x128xf32>
    %157 = arith.addf %151, %156 : vector<16x128xf32>
    %c32_i32_55 = arith.constant 32 : i32
    %158 = tpu.dynamic_rotate %140 by %c32_i32_55 dim 1 : vector<16x128xf32>, i32 -> vector<16x128xf32>
    %c3_56 = arith.constant 3 : index
    %c0_57 = arith.constant 0 : index
    %c0_58 = arith.constant 0 : index
    %159 = vector.load %arg4[%c3_56, %c0_57, %c0_58] : memref<12x1x128xf32, #tpu.memory_space<vmem>>, vector<1x1x128xf32>
    %160 = vector.shape_cast %159 : vector<1x1x128xf32> to vector<1x128xf32>
    %161 = vector.broadcast %160 : vector<1x128xf32> to vector<16x128xf32>
    %162 = arith.mulf %158, %161 : vector<16x128xf32>
    %163 = arith.addf %157, %162 : vector<16x128xf32>
    %c14_i32_59 = arith.constant 14 : i32
    %164 = tpu.dynamic_rotate %104 by %c14_i32_59 dim 0 : vector<16x128xf32>, i32 -> vector<16x128xf32>
    %cst_60 = arith.constant 0.000000e+00 : f32
    %165 = vector.broadcast %cst_60 : f32 to vector<16x128xf32>
    %166 = arith.select %64, %164, %165 : vector<16x128xi1>, vector<16x128xf32>
    %167 = arith.addf %118, %166 : vector<16x128xf32>
    %cst_61 = arith.constant 0xFF800000 : f32
    %168 = vector.broadcast %cst_61 : f32 to vector<16x128xf32>
    %169 = arith.select %64, %164, %168 : vector<16x128xi1>, vector<16x128xf32>
    %170 = arith.maximumf %121, %169 : vector<16x128xf32>
    %c2_i32_62 = arith.constant 2 : i32
    %171 = tpu.dynamic_rotate %104 by %c2_i32_62 dim 0 : vector<16x128xf32>, i32 -> vector<16x128xf32>
    %cst_63 = arith.constant 0.000000e+00 : f32
    %172 = vector.broadcast %cst_63 : f32 to vector<16x128xf32>
    %173 = arith.select %34, %171, %172 : vector<16x128xi1>, vector<16x128xf32>
    %174 = arith.addf %167, %173 : vector<16x128xf32>
    %cst_64 = arith.constant 0xFF800000 : f32
    %175 = vector.broadcast %cst_64 : f32 to vector<16x128xf32>
    %176 = arith.select %34, %171, %175 : vector<16x128xi1>, vector<16x128xf32>
    %177 = arith.maximumf %170, %176 : vector<16x128xf32>
    %c127_i32_65 = arith.constant 127 : i32
    %178 = tpu.dynamic_rotate %174 by %c127_i32_65 dim 1 : vector<16x128xf32>, i32 -> vector<16x128xf32>
    %cst_66 = arith.constant 0.000000e+00 : f32
    %179 = vector.broadcast %cst_66 : f32 to vector<16x128xf32>
    %180 = arith.select %59, %178, %179 : vector<16x128xi1>, vector<16x128xf32>
    %181 = arith.addf %174, %180 : vector<16x128xf32>
    %c127_i32_67 = arith.constant 127 : i32
    %182 = tpu.dynamic_rotate %177 by %c127_i32_67 dim 1 : vector<16x128xf32>, i32 -> vector<16x128xf32>
    %cst_68 = arith.constant 0xFF800000 : f32
    %183 = vector.broadcast %cst_68 : f32 to vector<16x128xf32>
    %184 = arith.select %59, %182, %183 : vector<16x128xi1>, vector<16x128xf32>
    %185 = arith.maximumf %177, %184 : vector<16x128xf32>
    %c1_i32_69 = arith.constant 1 : i32
    %186 = tpu.dynamic_rotate %174 by %c1_i32_69 dim 1 : vector<16x128xf32>, i32 -> vector<16x128xf32>
    %cst_70 = arith.constant 0.000000e+00 : f32
    %187 = vector.broadcast %cst_70 : f32 to vector<16x128xf32>
    %188 = arith.select %49, %186, %187 : vector<16x128xi1>, vector<16x128xf32>
    %189 = arith.addf %181, %188 : vector<16x128xf32>
    %c1_i32_71 = arith.constant 1 : i32
    %190 = tpu.dynamic_rotate %177 by %c1_i32_71 dim 1 : vector<16x128xf32>, i32 -> vector<16x128xf32>
    %cst_72 = arith.constant 0xFF800000 : f32
    %191 = vector.broadcast %cst_72 : f32 to vector<16x128xf32>
    %192 = arith.select %49, %190, %191 : vector<16x128xi1>, vector<16x128xf32>
    %193 = arith.maximumf %185, %192 : vector<16x128xf32>
    %c126_i32 = arith.constant 126 : i32
    %194 = tpu.dynamic_rotate %174 by %c126_i32 dim 1 : vector<16x128xf32>, i32 -> vector<16x128xf32>
    %cst_73 = arith.constant 0.000000e+00 : f32
    %195 = vector.broadcast %cst_73 : f32 to vector<16x128xf32>
    %196 = arith.select %69, %194, %195 : vector<16x128xi1>, vector<16x128xf32>
    %197 = arith.addf %189, %196 : vector<16x128xf32>
    %c126_i32_74 = arith.constant 126 : i32
    %198 = tpu.dynamic_rotate %177 by %c126_i32_74 dim 1 : vector<16x128xf32>, i32 -> vector<16x128xf32>
    %cst_75 = arith.constant 0xFF800000 : f32
    %199 = vector.broadcast %cst_75 : f32 to vector<16x128xf32>
    %200 = arith.select %69, %198, %199 : vector<16x128xi1>, vector<16x128xf32>
    %201 = arith.maximumf %193, %200 : vector<16x128xf32>
    %c2_i32_76 = arith.constant 2 : i32
    %202 = tpu.dynamic_rotate %174 by %c2_i32_76 dim 1 : vector<16x128xf32>, i32 -> vector<16x128xf32>
    %cst_77 = arith.constant 0.000000e+00 : f32
    %203 = vector.broadcast %cst_77 : f32 to vector<16x128xf32>
    %204 = arith.select %39, %202, %203 : vector<16x128xi1>, vector<16x128xf32>
    %205 = arith.addf %197, %204 : vector<16x128xf32>
    %c2_i32_78 = arith.constant 2 : i32
    %206 = tpu.dynamic_rotate %177 by %c2_i32_78 dim 1 : vector<16x128xf32>, i32 -> vector<16x128xf32>
    %cst_79 = arith.constant 0xFF800000 : f32
    %207 = vector.broadcast %cst_79 : f32 to vector<16x128xf32>
    %208 = arith.select %39, %206, %207 : vector<16x128xi1>, vector<16x128xf32>
    %209 = arith.maximumf %201, %208 : vector<16x128xf32>
    %cst_80 = arith.constant 4.000000e-02 : f32
    %210 = vector.broadcast %cst_80 : f32 to vector<16x128xf32>
    %211 = arith.mulf %205, %210 : vector<16x128xf32>
    %212 = arith.addf %209, %211 : vector<16x128xf32>
    %c4 = arith.constant 4 : index
    %c0_81 = arith.constant 0 : index
    %c0_82 = arith.constant 0 : index
    %213 = vector.load %arg4[%c4, %c0_81, %c0_82] : memref<12x1x128xf32, #tpu.memory_space<vmem>>, vector<1x1x128xf32>
    %214 = vector.shape_cast %213 : vector<1x1x128xf32> to vector<1x128xf32>
    %215 = vector.broadcast %214 : vector<1x128xf32> to vector<16x128xf32>
    %216 = arith.mulf %212, %215 : vector<16x128xf32>
    %217 = arith.addf %163, %216 : vector<16x128xf32>
    %c96_i32_83 = arith.constant 96 : i32
    %218 = tpu.dynamic_rotate %212 by %c96_i32_83 dim 1 : vector<16x128xf32>, i32 -> vector<16x128xf32>
    %c5 = arith.constant 5 : index
    %c0_84 = arith.constant 0 : index
    %c0_85 = arith.constant 0 : index
    %219 = vector.load %arg4[%c5, %c0_84, %c0_85] : memref<12x1x128xf32, #tpu.memory_space<vmem>>, vector<1x1x128xf32>
    %220 = vector.shape_cast %219 : vector<1x1x128xf32> to vector<1x128xf32>
    %221 = vector.broadcast %220 : vector<1x128xf32> to vector<16x128xf32>
    %222 = arith.mulf %218, %221 : vector<16x128xf32>
    %223 = arith.addf %217, %222 : vector<16x128xf32>
    %c64_i32_86 = arith.constant 64 : i32
    %224 = tpu.dynamic_rotate %212 by %c64_i32_86 dim 1 : vector<16x128xf32>, i32 -> vector<16x128xf32>
    %c6 = arith.constant 6 : index
    %c0_87 = arith.constant 0 : index
    %c0_88 = arith.constant 0 : index
    %225 = vector.load %arg4[%c6, %c0_87, %c0_88] : memref<12x1x128xf32, #tpu.memory_space<vmem>>, vector<1x1x128xf32>
    %226 = vector.shape_cast %225 : vector<1x1x128xf32> to vector<1x128xf32>
    %227 = vector.broadcast %226 : vector<1x128xf32> to vector<16x128xf32>
    %228 = arith.mulf %224, %227 : vector<16x128xf32>
    %229 = arith.addf %223, %228 : vector<16x128xf32>
    %c32_i32_89 = arith.constant 32 : i32
    %230 = tpu.dynamic_rotate %212 by %c32_i32_89 dim 1 : vector<16x128xf32>, i32 -> vector<16x128xf32>
    %c7 = arith.constant 7 : index
    %c0_90 = arith.constant 0 : index
    %c0_91 = arith.constant 0 : index
    %231 = vector.load %arg4[%c7, %c0_90, %c0_91] : memref<12x1x128xf32, #tpu.memory_space<vmem>>, vector<1x1x128xf32>
    %232 = vector.shape_cast %231 : vector<1x1x128xf32> to vector<1x128xf32>
    %233 = vector.broadcast %232 : vector<1x128xf32> to vector<16x128xf32>
    %234 = arith.mulf %230, %233 : vector<16x128xf32>
    %235 = arith.addf %229, %234 : vector<16x128xf32>
    %c13_i32_92 = arith.constant 13 : i32
    %236 = tpu.dynamic_rotate %104 by %c13_i32_92 dim 0 : vector<16x128xf32>, i32 -> vector<16x128xf32>
    %cst_93 = arith.constant 0.000000e+00 : f32
    %237 = vector.broadcast %cst_93 : f32 to vector<16x128xf32>
    %238 = arith.select %74, %236, %237 : vector<16x128xi1>, vector<16x128xf32>
    %239 = arith.addf %174, %238 : vector<16x128xf32>
    %cst_94 = arith.constant 0xFF800000 : f32
    %240 = vector.broadcast %cst_94 : f32 to vector<16x128xf32>
    %241 = arith.select %74, %236, %240 : vector<16x128xi1>, vector<16x128xf32>
    %242 = arith.maximumf %177, %241 : vector<16x128xf32>
    %c3_i32_95 = arith.constant 3 : i32
    %243 = tpu.dynamic_rotate %104 by %c3_i32_95 dim 0 : vector<16x128xf32>, i32 -> vector<16x128xf32>
    %cst_96 = arith.constant 0.000000e+00 : f32
    %244 = vector.broadcast %cst_96 : f32 to vector<16x128xf32>
    %245 = arith.select %24, %243, %244 : vector<16x128xi1>, vector<16x128xf32>
    %246 = arith.addf %239, %245 : vector<16x128xf32>
    %cst_97 = arith.constant 0xFF800000 : f32
    %247 = vector.broadcast %cst_97 : f32 to vector<16x128xf32>
    %248 = arith.select %24, %243, %247 : vector<16x128xi1>, vector<16x128xf32>
    %249 = arith.maximumf %242, %248 : vector<16x128xf32>
    %c127_i32_98 = arith.constant 127 : i32
    %250 = tpu.dynamic_rotate %246 by %c127_i32_98 dim 1 : vector<16x128xf32>, i32 -> vector<16x128xf32>
    %cst_99 = arith.constant 0.000000e+00 : f32
    %251 = vector.broadcast %cst_99 : f32 to vector<16x128xf32>
    %252 = arith.select %59, %250, %251 : vector<16x128xi1>, vector<16x128xf32>
    %253 = arith.addf %246, %252 : vector<16x128xf32>
    %c127_i32_100 = arith.constant 127 : i32
    %254 = tpu.dynamic_rotate %249 by %c127_i32_100 dim 1 : vector<16x128xf32>, i32 -> vector<16x128xf32>
    %cst_101 = arith.constant 0xFF800000 : f32
    %255 = vector.broadcast %cst_101 : f32 to vector<16x128xf32>
    %256 = arith.select %59, %254, %255 : vector<16x128xi1>, vector<16x128xf32>
    %257 = arith.maximumf %249, %256 : vector<16x128xf32>
    %c1_i32_102 = arith.constant 1 : i32
    %258 = tpu.dynamic_rotate %246 by %c1_i32_102 dim 1 : vector<16x128xf32>, i32 -> vector<16x128xf32>
    %cst_103 = arith.constant 0.000000e+00 : f32
    %259 = vector.broadcast %cst_103 : f32 to vector<16x128xf32>
    %260 = arith.select %49, %258, %259 : vector<16x128xi1>, vector<16x128xf32>
    %261 = arith.addf %253, %260 : vector<16x128xf32>
    %c1_i32_104 = arith.constant 1 : i32
    %262 = tpu.dynamic_rotate %249 by %c1_i32_104 dim 1 : vector<16x128xf32>, i32 -> vector<16x128xf32>
    %cst_105 = arith.constant 0xFF800000 : f32
    %263 = vector.broadcast %cst_105 : f32 to vector<16x128xf32>
    %264 = arith.select %49, %262, %263 : vector<16x128xi1>, vector<16x128xf32>
    %265 = arith.maximumf %257, %264 : vector<16x128xf32>
    %c126_i32_106 = arith.constant 126 : i32
    %266 = tpu.dynamic_rotate %246 by %c126_i32_106 dim 1 : vector<16x128xf32>, i32 -> vector<16x128xf32>
    %cst_107 = arith.constant 0.000000e+00 : f32
    %267 = vector.broadcast %cst_107 : f32 to vector<16x128xf32>
    %268 = arith.select %69, %266, %267 : vector<16x128xi1>, vector<16x128xf32>
    %269 = arith.addf %261, %268 : vector<16x128xf32>
    %c126_i32_108 = arith.constant 126 : i32
    %270 = tpu.dynamic_rotate %249 by %c126_i32_108 dim 1 : vector<16x128xf32>, i32 -> vector<16x128xf32>
    %cst_109 = arith.constant 0xFF800000 : f32
    %271 = vector.broadcast %cst_109 : f32 to vector<16x128xf32>
    %272 = arith.select %69, %270, %271 : vector<16x128xi1>, vector<16x128xf32>
    %273 = arith.maximumf %265, %272 : vector<16x128xf32>
    %c2_i32_110 = arith.constant 2 : i32
    %274 = tpu.dynamic_rotate %246 by %c2_i32_110 dim 1 : vector<16x128xf32>, i32 -> vector<16x128xf32>
    %cst_111 = arith.constant 0.000000e+00 : f32
    %275 = vector.broadcast %cst_111 : f32 to vector<16x128xf32>
    %276 = arith.select %39, %274, %275 : vector<16x128xi1>, vector<16x128xf32>
    %277 = arith.addf %269, %276 : vector<16x128xf32>
    %c2_i32_112 = arith.constant 2 : i32
    %278 = tpu.dynamic_rotate %249 by %c2_i32_112 dim 1 : vector<16x128xf32>, i32 -> vector<16x128xf32>
    %cst_113 = arith.constant 0xFF800000 : f32
    %279 = vector.broadcast %cst_113 : f32 to vector<16x128xf32>
    %280 = arith.select %39, %278, %279 : vector<16x128xi1>, vector<16x128xf32>
    %281 = arith.maximumf %273, %280 : vector<16x128xf32>
    %c125_i32 = arith.constant 125 : i32
    %282 = tpu.dynamic_rotate %246 by %c125_i32 dim 1 : vector<16x128xf32>, i32 -> vector<16x128xf32>
    %cst_114 = arith.constant 0.000000e+00 : f32
    %283 = vector.broadcast %cst_114 : f32 to vector<16x128xf32>
    %284 = arith.select %79, %282, %283 : vector<16x128xi1>, vector<16x128xf32>
    %285 = arith.addf %277, %284 : vector<16x128xf32>
    %c125_i32_115 = arith.constant 125 : i32
    %286 = tpu.dynamic_rotate %249 by %c125_i32_115 dim 1 : vector<16x128xf32>, i32 -> vector<16x128xf32>
    %cst_116 = arith.constant 0xFF800000 : f32
    %287 = vector.broadcast %cst_116 : f32 to vector<16x128xf32>
    %288 = arith.select %79, %286, %287 : vector<16x128xi1>, vector<16x128xf32>
    %289 = arith.maximumf %281, %288 : vector<16x128xf32>
    %c3_i32_117 = arith.constant 3 : i32
    %290 = tpu.dynamic_rotate %246 by %c3_i32_117 dim 1 : vector<16x128xf32>, i32 -> vector<16x128xf32>
    %cst_118 = arith.constant 0.000000e+00 : f32
    %291 = vector.broadcast %cst_118 : f32 to vector<16x128xf32>
    %292 = arith.select %29, %290, %291 : vector<16x128xi1>, vector<16x128xf32>
    %293 = arith.addf %285, %292 : vector<16x128xf32>
    %c3_i32_119 = arith.constant 3 : i32
    %294 = tpu.dynamic_rotate %249 by %c3_i32_119 dim 1 : vector<16x128xf32>, i32 -> vector<16x128xf32>
    %cst_120 = arith.constant 0xFF800000 : f32
    %295 = vector.broadcast %cst_120 : f32 to vector<16x128xf32>
    %296 = arith.select %29, %294, %295 : vector<16x128xi1>, vector<16x128xf32>
    %297 = arith.maximumf %289, %296 : vector<16x128xf32>
    %cst_121 = arith.constant 0.0204081628 : f32
    %298 = vector.broadcast %cst_121 : f32 to vector<16x128xf32>
    %299 = arith.mulf %293, %298 : vector<16x128xf32>
    %300 = arith.addf %297, %299 : vector<16x128xf32>
    %c8 = arith.constant 8 : index
    %c0_122 = arith.constant 0 : index
    %c0_123 = arith.constant 0 : index
    %301 = vector.load %arg4[%c8, %c0_122, %c0_123] : memref<12x1x128xf32, #tpu.memory_space<vmem>>, vector<1x1x128xf32>
    %302 = vector.shape_cast %301 : vector<1x1x128xf32> to vector<1x128xf32>
    %303 = vector.broadcast %302 : vector<1x128xf32> to vector<16x128xf32>
    %304 = arith.mulf %300, %303 : vector<16x128xf32>
    %305 = arith.addf %235, %304 : vector<16x128xf32>
    %c96_i32_124 = arith.constant 96 : i32
    %306 = tpu.dynamic_rotate %300 by %c96_i32_124 dim 1 : vector<16x128xf32>, i32 -> vector<16x128xf32>
    %c9 = arith.constant 9 : index
    %c0_125 = arith.constant 0 : index
    %c0_126 = arith.constant 0 : index
    %307 = vector.load %arg4[%c9, %c0_125, %c0_126] : memref<12x1x128xf32, #tpu.memory_space<vmem>>, vector<1x1x128xf32>
    %308 = vector.shape_cast %307 : vector<1x1x128xf32> to vector<1x128xf32>
    %309 = vector.broadcast %308 : vector<1x128xf32> to vector<16x128xf32>
    %310 = arith.mulf %306, %309 : vector<16x128xf32>
    %311 = arith.addf %305, %310 : vector<16x128xf32>
    %c64_i32_127 = arith.constant 64 : i32
    %312 = tpu.dynamic_rotate %300 by %c64_i32_127 dim 1 : vector<16x128xf32>, i32 -> vector<16x128xf32>
    %c10 = arith.constant 10 : index
    %c0_128 = arith.constant 0 : index
    %c0_129 = arith.constant 0 : index
    %313 = vector.load %arg4[%c10, %c0_128, %c0_129] : memref<12x1x128xf32, #tpu.memory_space<vmem>>, vector<1x1x128xf32>
    %314 = vector.shape_cast %313 : vector<1x1x128xf32> to vector<1x128xf32>
    %315 = vector.broadcast %314 : vector<1x128xf32> to vector<16x128xf32>
    %316 = arith.mulf %312, %315 : vector<16x128xf32>
    %317 = arith.addf %311, %316 : vector<16x128xf32>
    %c32_i32_130 = arith.constant 32 : i32
    %318 = tpu.dynamic_rotate %300 by %c32_i32_130 dim 1 : vector<16x128xf32>, i32 -> vector<16x128xf32>
    %c11 = arith.constant 11 : index
    %c0_131 = arith.constant 0 : index
    %c0_132 = arith.constant 0 : index
    %319 = vector.load %arg4[%c11, %c0_131, %c0_132] : memref<12x1x128xf32, #tpu.memory_space<vmem>>, vector<1x1x128xf32>
    %320 = vector.shape_cast %319 : vector<1x1x128xf32> to vector<1x128xf32>
    %321 = vector.broadcast %320 : vector<1x128xf32> to vector<16x128xf32>
    %322 = arith.mulf %318, %321 : vector<16x128xf32>
    %323 = arith.addf %317, %322 : vector<16x128xf32>
    %c0_133 = arith.constant 0 : index
    %c0_134 = arith.constant 0 : index
    %c0_135 = arith.constant 0 : index
    %324 = vector.load %arg6[%c0_133, %c0_134, %c0_135] : memref<1x16x128xf32, #tpu.memory_space<vmem>>, vector<1x16x128xf32>
    %325 = vector.shape_cast %324 : vector<1x16x128xf32> to vector<16x128xf32>
    %326 = vector.shape_cast %323 : vector<16x128xf32> to vector<1x16x128xf32>
    tpu.vector_store %arg6[%c0_133, %c0_134, %c0_135], %326 {strides = array<i32>} : memref<1x16x128xf32, #tpu.memory_space<vmem>>, vector<1x16x128xf32>,
    return
  }
  func.func @transform_0(%arg0: i32) -> (i32, i32, i32) {
    %c0_i32 = arith.constant 0 : i32
    %c0_i32_0 = arith.constant 0 : i32
    %c0_i32_1 = arith.constant 0 : i32
    return %arg0, %c0_i32, %c0_i32_0 : i32, i32, i32
  }
  func.func @transform_1(%arg0: i32) -> (i32, i32, i32) {
    %c0_i32 = arith.constant 0 : i32
    %c0_i32_0 = arith.constant 0 : i32
    %c0_i32_1 = arith.constant 0 : i32
    %c0_i32_2 = arith.constant 0 : i32
    return %c0_i32, %c0_i32_0, %c0_i32_1 : i32, i32, i32
  }
  func.func @transform_2(%arg0: i32) -> (i32, i32) {
    %c0_i32 = arith.constant 0 : i32
    %c0_i32_0 = arith.constant 0 : i32
    %c0_i32_1 = arith.constant 0 : i32
    return %c0_i32, %c0_i32_0 : i32, i32
  }
  func.func @transform_3(%arg0: i32) -> (i32, i32, i32) {
    %c0_i32 = arith.constant 0 : i32
    %c0_i32_0 = arith.constant 0 : i32
    %c0_i32_1 = arith.constant 0 : i32
    %c0_i32_2 = arith.constant 0 : i32
    return %c0_i32, %c0_i32_0, %c0_i32_1 : i32, i32, i32
  }
  func.func @transform_4(%arg0: i32) -> (i32, i32) {
    %c0_i32 = arith.constant 0 : i32
    %c0_i32_0 = arith.constant 0 : i32
    %c0_i32_1 = arith.constant 0 : i32
    return %c0_i32, %c0_i32_0 : i32, i32
  }
  func.func @transform_5(%arg0: i32) -> (i32, i32, i32) {
    %c0_i32 = arith.constant 0 : i32
    %c0_i32_0 = arith.constant 0 : i32
    %c0_i32_1 = arith.constant 0 : i32
    return %arg0, %c0_i32, %c0_i32_0 : i32, i32, i32
  }
}

</mosaic_0001>

<llo_original>
// kernel: mrcb_forward.1
$region0: #{mrcb_forward.1}
  #allocation0 [shape = 'u32[]', space=smem, size = 0x4, offset = 0x4, fixed_abs, tag = 'smem constant byte address 0x4 - core index']
  #allocation1 [shape = 'u32[144,128]{1,0:T(1,128)}', space=vmem, size = 0x12000, scoped, tag = 'internal scratch']
  %s0 = inlined_call_operand.vmem [shape: f32[1,16,128], index: 0, kind: input, shape index: {}]
  %s1 = inlined_call_operand.vmem [shape: f32[4,1,128], index: 1, kind: input, shape index: {}]
  %s2 = inlined_call_operand.vmem [shape: f32[1,128], index: 2, kind: input, shape index: {}]
  %s3 = inlined_call_operand.vmem [shape: f32[12,1,128], index: 3, kind: input, shape index: {}]
  %s4 = inlined_call_operand.vmem [shape: f32[1,128], index: 4, kind: input, shape index: {}]
  %s5 = inlined_call_operand.vmem [shape: f32[1,16,128], index: 5, kind: output, shape index: {}]
  %s6 = sld [smem:[#allocation0]]
  $region30: #{mrcb_forward.1} parent=0
    _
  %s8 = ssub.s32 1, %s6
  %s9 = scalar_select 0, %s8, %s6
  // Predicated region
  $region2: #{mrcb_forward.1} parent=0 // pred_check
    _
  $region3: #{mrcb_forward.1} parent=0 // pred_check_branch
    %11 = sbr.rel (0) target = $region5
  $region4: #{mrcb_forward.1} parent=0 // pred_region
    _
  $region5: #{mrcb_forward.1} parent=0 // pred_fallthru
    _
  // Predicated region
  $region6: #{mrcb_forward.1} parent=0 // pred_check
    _
  $region7: #{mrcb_forward.1} parent=0 // pred_check_branch
    %13 = sbr.rel (0) target = $region9
  $region8: #{mrcb_forward.1} parent=0 // pred_region
    _
  $region9: #{mrcb_forward.1} parent=0 // pred_fallthru
    _
  // Predicated region
  $region10: #{mrcb_forward.1} parent=0 // pred_check
    _
  $region11: #{mrcb_forward.1} parent=0 // pred_check_branch
    %15 = sbr.rel (0) target = $region13
  $region12: #{mrcb_forward.1} parent=0 // pred_region
    _
  $region13: #{mrcb_forward.1} parent=0 // pred_fallthru
    _
  // Predicated region
  $region14: #{mrcb_forward.1} parent=0 // pred_check
    _
  $region15: #{mrcb_forward.1} parent=0 // pred_check_branch
    %17 = sbr.rel (0) target = $region17
  $region16: #{mrcb_forward.1} parent=0 // pred_region
    _
  $region17: #{mrcb_forward.1} parent=0 // pred_fallthru
    _
  // Predicated region
  $region18: #{mrcb_forward.1} parent=0 // pred_check
    _
  $region19: #{mrcb_forward.1} parent=0 // pred_check_branch
    %19 = sbr.rel (0) target = $region21
  $region20: #{mrcb_forward.1} parent=0 // pred_region
    _
  $region21: #{mrcb_forward.1} parent=0 // pred_fallthru
    _
  %v20 = vld [vmem:[%s0] sm:$0xff]
  %v21 = vld [vmem:[%s0 + $0x8] sm:$0xff]
  %v22 = vlaneseq
  %v23 = vshrl.u32 %v22, 7
  %v24 = vadd.s32 %v23, 8
  %v25 = vlaneseq
  %v26 = vand.u32 %v25, 127
  %vm27 = vcmp.lt.s32.totalorder %v26, 0
  %v28 = vsub.s32 0, %v26
  %v29 = vsel %vm27, %v28, %v26
  %v30 = vshrl.u32 %v29, 4
  %v31 = vand.u32 %v29, 15
  %v32 = vsub.s32 0, %v31
  %v33 = vsel %vm27, %v32, %v31
  %vm34 = vcmp.ne.s32.totalorder %v33, 0
  %vm35 = vcmp.lt.s32.totalorder %v33, 0
  %vm36 = vmand %vm35, %vm34
  %v37 = vadd.s32 %v33, 16
  %v38 = vsel %vm36, %v37, %v33
  %vm39 = vcmp.ge.s32.totalorder %v23, 3
  %vm40 = vcmp.ge.s32.totalorder %v24, 3
  %vm41 = vcmp.lt.s32.totalorder %v23, 19
  %vm42 = vcmp.lt.s32.totalorder %v24, 19
  %vm43 = vmand %vm39, %vm41
  %vm44 = vmand %vm40, %vm42
  %vm45 = vcmp.ge.s32.totalorder %v38, 3
  %vm46 = vcmp.lt.s32.totalorder %v38, 19
  %vm47 = vmand %vm45, %vm46
  %vm48 = vcmp.ge.s32.totalorder %v23, 2
  %vm49 = vcmp.ge.s32.totalorder %v24, 2
  %vm50 = vcmp.lt.s32.totalorder %v23, 18
  %vm51 = vcmp.lt.s32.totalorder %v24, 18
  %vm52 = vmand %vm48, %vm50
  %vm53 = vmand %vm49, %vm51
  %vm54 = vcmp.ge.s32.totalorder %v38, 2
  %vm55 = vcmp.lt.s32.totalorder %v38, 18
  %vm56 = vmand %vm54, %vm55
  %vm57 = vcmp.ge.s32.totalorder %v23, 1
  %vm58 = vcmp.ge.s32.totalorder %v24, 1
  %vm59 = vcmp.lt.s32.totalorder %v23, 17
  %vm60 = vcmp.lt.s32.totalorder %v24, 17
  %vm61 = vmand %vm57, %vm59
  %vm62 = vmand %vm58, %vm60
  %vm63 = vcmp.ge.s32.totalorder %v38, 1
  %vm64 = vcmp.lt.s32.totalorder %v38, 17
  %vm65 = vmand %vm63, %vm64
  %vm66 = vcmp.ge.s32.totalorder %v23, 4294967295
  %vm67 = vcmp.ge.s32.totalorder %v24, 4294967295
  %vm68 = vcmp.lt.s32.totalorder %v23, 15
  %vm69 = vcmp.lt.s32.totalorder %v24, 15
  %vm70 = vmand %vm66, %vm68
  %vm71 = vmand %vm67, %vm69
  %vm72 = vcmp.ge.s32.totalorder %v38, 4294967295
  %vm73 = vcmp.lt.s32.totalorder %v38, 15
  %vm74 = vmand %vm72, %vm73
  %vm75 = vcmp.ge.s32.totalorder %v23, 4294967294
  %vm76 = vcmp.ge.s32.totalorder %v24, 4294967294
  %vm77 = vcmp.lt.s32.totalorder %v23, 14
  %vm78 = vcmp.lt.s32.totalorder %v24, 14
  %vm79 = vmand %vm75, %vm77
  %vm80 = vmand %vm76, %vm78
  %vm81 = vcmp.ge.s32.totalorder %v38, 4294967294
  %vm82 = vcmp.lt.s32.totalorder %v38, 14
  %vm83 = vmand %vm81, %vm82
  %vm84 = vcmp.ge.s32.totalorder %v23, 4294967293
  %vm85 = vcmp.ge.s32.totalorder %v24, 4294967293
  %vm86 = vcmp.lt.s32.totalorder %v23, 13
  %vm87 = vcmp.lt.s32.totalorder %v24, 13
  %vm88 = vmand %vm84, %vm86
  %vm89 = vmand %vm85, %vm87
  %vm90 = vcmp.ge.s32.totalorder %v38, 4294967293
  %vm91 = vcmp.lt.s32.totalorder %v38, 13
  %vm92 = vmand %vm90, %vm91
  %v93 = vld [vmem:[%s1] sm:$0x1]
  %v95 = vlaneseq
  %v96 = vshrl.u32 %v95, 7
  %v97 = vsub.s32 0, %v96
  %v98 = vrot.slane %v93, %v97
  %v100 = vmul.f32 %v20, %v98
  %v101 = vmul.f32 %v21, %v98
  %v102 = vld [vmem:[%s2] sm:$0x1]
  %v104 = vlaneseq
  %v105 = vshrl.u32 %v104, 7
  %v106 = vsub.s32 0, %v105
  %v107 = vrot.slane %v102, %v106
  %v109 = vadd.f32 %v100, %v107
  %v110 = vadd.f32 %v101, %v107
  %111 = vrot.lane.b32.xlu0 %v20, 96
  %v112 = vpop.permute.xlu0 %111
  %113 = vrot.lane.b32.xlu0 %v21, 96
  %v114 = vpop.permute.xlu0 %113
  %s115 = scalar_lea.vmem %s1, 1
  %v116 = vld [vmem:[%s115] sm:$0x1]
  %v118 = vlaneseq
  %v119 = vshrl.u32 %v118, 7
  %v120 = vsub.s32 0, %v119
  %v121 = vrot.slane %v116, %v120
  %v123 = vmul.f32 %v112, %v121
  %v124 = vmul.f32 %v114, %v121
  %v125 = vadd.f32 %v109, %v123
  %v126 = vadd.f32 %v110, %v124
  %127 = vrot.lane.b32.xlu0 %v20, 64
  %v128 = vpop.permute.xlu0 %127
  %129 = vrot.lane.b32.xlu0 %v21, 64
  %v130 = vpop.permute.xlu0 %129
  %s131 = scalar_lea.vmem %s1, 2
  %v132 = vld [vmem:[%s131] sm:$0x1]
  %v134 = vlaneseq
  %v135 = vshrl.u32 %v134, 7
  %v136 = vsub.s32 0, %v135
  %v137 = vrot.slane %v132, %v136
  %v139 = vmul.f32 %v128, %v137
  %v140 = vmul.f32 %v130, %v137
  %v141 = vadd.f32 %v125, %v139
  %v142 = vadd.f32 %v126, %v140
  %143 = vrot.lane.b32.xlu0 %v20, 32
  %v144 = vpop.permute.xlu0 %143
  %145 = vrot.lane.b32.xlu0 %v21, 32
  %v146 = vpop.permute.xlu0 %145
  %s147 = scalar_lea.vmem %s1, 3
  %v148 = vld [vmem:[%s147] sm:$0x1]
  %v150 = vlaneseq
  %v151 = vshrl.u32 %v150, 7
  %v152 = vsub.s32 0, %v151
  %v153 = vrot.slane %v148, %v152
  %v155 = vmul.f32 %v144, %v153
  %v156 = vmul.f32 %v146, %v153
  %v157 = vadd.f32 %v141, %v155
  %v158 = vadd.f32 %v142, %v156
  %v159 = vld [vmem:[%s4] sm:$0x1]
  %v161 = vlaneseq
  %v162 = vshrl.u32 %v161, 7
  %v163 = vsub.s32 0, %v162
  %v164 = vrot.slane %v159, %v163
  %v166 = vadd.f32 %v20, %v164
  %v167 = vadd.f32 %v21, %v164
  %v168 = vrot.slane %v157, 1
  %v169 = vrot.slane %v158, 1
  %vm170 = vcmp.lt.s32.totalorder %v23, 7
  %v171 = vsel %vm170, %v168, %v169
  %v172 = vsel %vm170, %v169, %v168
  %v173 = vsel %vm70, %v171, 0.0
  %v174 = vsel %vm71, %v172, 0.0
  %v175 = vadd.f32 %v157, %v173
  %v176 = vadd.f32 %v158, %v174
  %v177 = vsel %vm70, %v171, -inf
  %v178 = vsel %vm71, %v172, -inf
  %v179 = vmax.f32 %v157, %v177
  %v180 = vmax.f32 %v158, %v178
  %v181 = vrot.slane %v157, 7
  %v182 = vrot.slane %v158, 7
  %vm183 = vcmp.lt.s32.totalorder %v23, 1
  %v184 = vsel %vm183, %v181, %v182
  %v185 = vsel %vm183, %v182, %v181
  %v186 = vsel %vm61, %v185, 0.0
  %v187 = vsel %vm62, %v184, 0.0
  %v188 = vadd.f32 %v175, %v186
  %v189 = vadd.f32 %v176, %v187
  %v190 = vsel %vm61, %v185, -inf
  %v191 = vsel %vm62, %v184, -inf
  %v192 = vmax.f32 %v179, %v190
  %v193 = vmax.f32 %v180, %v191
  %194 = vrot.lane.b32.xlu0 %v188, 127
  %v195 = vpop.permute.xlu0 %194
  %196 = vrot.lane.b32.xlu0 %v189, 127
  %v197 = vpop.permute.xlu0 %196
  %v198 = vsel %vm74, %v195, 0.0
  %v199 = vsel %vm74, %v197, 0.0
  %v200 = vadd.f32 %v188, %v198
  %v201 = vadd.f32 %v189, %v199
  %202 = vrot.lane.b32.xlu0 %v192, 127
  %v203 = vpop.permute.xlu0 %202
  %204 = vrot.lane.b32.xlu0 %v193, 127
  %v205 = vpop.permute.xlu0 %204
  %v206 = vsel %vm74, %v203, -inf
  %v207 = vsel %vm74, %v205, -inf
  %v208 = vmax.f32 %v192, %v206
  %v209 = vmax.f32 %v193, %v207
  %210 = vrot.lane.b32.xlu0 %v188, 1
  %v211 = vpop.permute.xlu0 %210
  %212 = vrot.lane.b32.xlu0 %v189, 1
  %v213 = vpop.permute.xlu0 %212
  %v214 = vsel %vm65, %v211, 0.0
  %v215 = vsel %vm65, %v213, 0.0
  %v216 = vadd.f32 %v200, %v214
  %v217 = vadd.f32 %v201, %v215
  %218 = vrot.lane.b32.xlu0 %v192, 1
  %v219 = vpop.permute.xlu0 %218
  %220 = vrot.lane.b32.xlu0 %v193, 1
  %v221 = vpop.permute.xlu0 %220
  %v222 = vsel %vm65, %v219, -inf
  %v223 = vsel %vm65, %v221, -inf
  %v224 = vmax.f32 %v208, %v222
  %v225 = vmax.f32 %v209, %v223
  %v226 = vmul.f32 %v216, 0.11111111
  %v227 = vmul.f32 %v217, 0.11111111
  %v228 = vadd.f32 %v224, %v226
  %v229 = vadd.f32 %v225, %v227
  %v230 = vld [vmem:[%s3] sm:$0x1]
  %v232 = vlaneseq
  %v233 = vshrl.u32 %v232, 7
  %v234 = vsub.s32 0, %v233
  %v235 = vrot.slane %v230, %v234
  %v237 = vmul.f32 %v228, %v235
  %v238 = vmul.f32 %v229, %v235
  %v239 = vadd.f32 %v166, %v237
  %v240 = vadd.f32 %v167, %v238
  %241 = vrot.lane.b32.xlu0 %v228, 96
  %v242 = vpop.permute.xlu0 %241
  %243 = vrot.lane.b32.xlu0 %v229, 96
  %v244 = vpop.permute.xlu0 %243
  %s245 = scalar_lea.vmem %s3, 1
  %v246 = vld [vmem:[%s245] sm:$0x1]
  %v248 = vlaneseq
  %v249 = vshrl.u32 %v248, 7
  %v250 = vsub.s32 0, %v249
  %v251 = vrot.slane %v246, %v250
  %v253 = vmul.f32 %v242, %v251
  %v254 = vmul.f32 %v244, %v251
  %v255 = vadd.f32 %v239, %v253
  %v256 = vadd.f32 %v240, %v254
  %257 = vrot.lane.b32.xlu0 %v228, 64
  %v258 = vpop.permute.xlu0 %257
  %259 = vrot.lane.b32.xlu0 %v229, 64
  %v260 = vpop.permute.xlu0 %259
  %s261 = scalar_lea.vmem %s3, 2
  %v262 = vld [vmem:[%s261] sm:$0x1]
  %v264 = vlaneseq
  %v265 = vshrl.u32 %v264, 7
  %v266 = vsub.s32 0, %v265
  %v267 = vrot.slane %v262, %v266
  %v269 = vmul.f32 %v258, %v267
  %v270 = vmul.f32 %v260, %v267
  %v271 = vadd.f32 %v255, %v269
  %v272 = vadd.f32 %v256, %v270
  %273 = vrot.lane.b32.xlu0 %v228, 32
  %v274 = vpop.permute.xlu0 %273
  %275 = vrot.lane.b32.xlu0 %v229, 32
  %v276 = vpop.permute.xlu0 %275
  %s277 = scalar_lea.vmem %s3, 3
  %v278 = vld [vmem:[%s277] sm:$0x1]
  %v280 = vlaneseq
  %v281 = vshrl.u32 %v280, 7
  %v282 = vsub.s32 0, %v281
  %v283 = vrot.slane %v278, %v282
  %v285 = vmul.f32 %v274, %v283
  %v286 = vmul.f32 %v276, %v283
  %v287 = vadd.f32 %v271, %v285
  %v288 = vadd.f32 %v272, %v286
  %v289 = vrot.slane %v157, 2
  %v290 = vrot.slane %v158, 2
  %vm291 = vcmp.lt.s32.totalorder %v23, 6
  %v292 = vsel %vm291, %v289, %v290
  %v293 = vsel %vm291, %v290, %v289
  %v294 = vsel %vm79, %v292, 0.0
  %v295 = vsel %vm80, %v293, 0.0
  %v296 = vadd.f32 %v188, %v294
  %v297 = vadd.f32 %v189, %v295
  %v298 = vsel %vm79, %v292, -inf
  %v299 = vsel %vm80, %v293, -inf
  %v300 = vmax.f32 %v192, %v298
  %v301 = vmax.f32 %v193, %v299
  %v302 = vrot.slane %v157, 6
  %v303 = vrot.slane %v158, 6
  %vm304 = vcmp.lt.s32.totalorder %v23, 2
  %v305 = vsel %vm304, %v302, %v303
  %v306 = vsel %vm304, %v303, %v302
  %v307 = vsel %vm52, %v306, 0.0
  %v308 = vsel %vm53, %v305, 0.0
  %v309 = vadd.f32 %v296, %v307
  %v310 = vadd.f32 %v297, %v308
  %v311 = vsel %vm52, %v306, -inf
  %v312 = vsel %vm53, %v305, -inf
  %v313 = vmax.f32 %v300, %v311
  %v314 = vmax.f32 %v301, %v312
  %315 = vrot.lane.b32.xlu0 %v309, 127
  %v316 = vpop.permute.xlu0 %315
  %317 = vrot.lane.b32.xlu0 %v310, 127
  %v318 = vpop.permute.xlu0 %317
  %v319 = vsel %vm74, %v316, 0.0
  %v320 = vsel %vm74, %v318, 0.0
  %v321 = vadd.f32 %v309, %v319
  %v322 = vadd.f32 %v310, %v320
  %323 = vrot.lane.b32.xlu0 %v313, 127
  %v324 = vpop.permute.xlu0 %323
  %325 = vrot.lane.b32.xlu0 %v314, 127
  %v326 = vpop.permute.xlu0 %325
  %v327 = vsel %vm74, %v324, -inf
  %v328 = vsel %vm74, %v326, -inf
  %v329 = vmax.f32 %v313, %v327
  %v330 = vmax.f32 %v314, %v328
  %331 = vrot.lane.b32.xlu0 %v309, 1
  %v332 = vpop.permute.xlu0 %331
  %333 = vrot.lane.b32.xlu0 %v310, 1
  %v334 = vpop.permute.xlu0 %333
  %v335 = vsel %vm65, %v332, 0.0
  %v336 = vsel %vm65, %v334, 0.0
  %v337 = vadd.f32 %v321, %v335
  %v338 = vadd.f32 %v322, %v336
  %339 = vrot.lane.b32.xlu0 %v313, 1
  %v340 = vpop.permute.xlu0 %339
  %341 = vrot.lane.b32.xlu0 %v314, 1
  %v342 = vpop.permute.xlu0 %341
  %v343 = vsel %vm65, %v340, -inf
  %v344 = vsel %vm65, %v342, -inf
  %v345 = vmax.f32 %v329, %v343
  %v346 = vmax.f32 %v330, %v344
  %347 = vrot.lane.b32.xlu0 %v309, 126
  %v348 = vpop.permute.xlu0 %347
  %349 = vrot.lane.b32.xlu0 %v310, 126
  %v350 = vpop.permute.xlu0 %349
  %v351 = vsel %vm83, %v348, 0.0
  %v352 = vsel %vm83, %v350, 0.0
  %v353 = vadd.f32 %v337, %v351
  %v354 = vadd.f32 %v338, %v352
  %355 = vrot.lane.b32.xlu0 %v313, 126
  %v356 = vpop.permute.xlu0 %355
  %357 = vrot.lane.b32.xlu0 %v314, 126
  %v358 = vpop.permute.xlu0 %357
  %v359 = vsel %vm83, %v356, -inf
  %v360 = vsel %vm83, %v358, -inf
  %v361 = vmax.f32 %v345, %v359
  %v362 = vmax.f32 %v346, %v360
  %363 = vrot.lane.b32.xlu0 %v309, 2
  %v364 = vpop.permute.xlu0 %363
  %365 = vrot.lane.b32.xlu0 %v310, 2
  %v366 = vpop.permute.xlu0 %365
  %v367 = vsel %vm56, %v364, 0.0
  %v368 = vsel %vm56, %v366, 0.0
  %v369 = vadd.f32 %v353, %v367
  %v370 = vadd.f32 %v354, %v368
  %371 = vrot.lane.b32.xlu0 %v313, 2
  %v372 = vpop.permute.xlu0 %371
  %373 = vrot.lane.b32.xlu0 %v314, 2
  %v374 = vpop.permute.xlu0 %373
  %v375 = vsel %vm56, %v372, -inf
  %v376 = vsel %vm56, %v374, -inf
  %v377 = vmax.f32 %v361, %v375
  %v378 = vmax.f32 %v362, %v376
  %v379 = vmul.f32 %v369, 0.04
  %v380 = vmul.f32 %v370, 0.04
  %v381 = vadd.f32 %v377, %v379
  %v382 = vadd.f32 %v378, %v380
  %s383 = scalar_lea.vmem %s3, 4
  %v384 = vld [vmem:[%s383] sm:$0x1]
  %v386 = vlaneseq
  %v387 = vshrl.u32 %v386, 7
  %v388 = vsub.s32 0, %v387
  %v389 = vrot.slane %v384, %v388
  %v391 = vmul.f32 %v381, %v389
  %v392 = vmul.f32 %v382, %v389
  %v393 = vadd.f32 %v287, %v391
  %v394 = vadd.f32 %v288, %v392
  %395 = vrot.lane.b32.xlu0 %v381, 96
  %v396 = vpop.permute.xlu0 %395
  %397 = vrot.lane.b32.xlu0 %v382, 96
  %v398 = vpop.permute.xlu0 %397
  %s399 = scalar_lea.vmem %s3, 5
  %v400 = vld [vmem:[%s399] sm:$0x1]
  %v402 = vlaneseq
  %v403 = vshrl.u32 %v402, 7
  %v404 = vsub.s32 0, %v403
  %v405 = vrot.slane %v400, %v404
  %v407 = vmul.f32 %v396, %v405
  %v408 = vmul.f32 %v398, %v405
  %v409 = vadd.f32 %v393, %v407
  %v410 = vadd.f32 %v394, %v408
  %411 = vrot.lane.b32.xlu0 %v381, 64
  %v412 = vpop.permute.xlu0 %411
  %413 = vrot.lane.b32.xlu0 %v382, 64
  %v414 = vpop.permute.xlu0 %413
  %s415 = scalar_lea.vmem %s3, 6
  %v416 = vld [vmem:[%s415] sm:$0x1]
  %v418 = vlaneseq
  %v419 = vshrl.u32 %v418, 7
  %v420 = vsub.s32 0, %v419
  %v421 = vrot.slane %v416, %v420
  %v423 = vmul.f32 %v412, %v421
  %v424 = vmul.f32 %v414, %v421
  %v425 = vadd.f32 %v409, %v423
  %v426 = vadd.f32 %v410, %v424
  %427 = vrot.lane.b32.xlu0 %v381, 32
  %v428 = vpop.permute.xlu0 %427
  %429 = vrot.lane.b32.xlu0 %v382, 32
  %v430 = vpop.permute.xlu0 %429
  %s431 = scalar_lea.vmem %s3, 7
  %v432 = vld [vmem:[%s431] sm:$0x1]
  %v434 = vlaneseq
  %v435 = vshrl.u32 %v434, 7
  %v436 = vsub.s32 0, %v435
  %v437 = vrot.slane %v432, %v436
  %v439 = vmul.f32 %v428, %v437
  %v440 = vmul.f32 %v430, %v437
  %v441 = vadd.f32 %v425, %v439
  %v442 = vadd.f32 %v426, %v440
  %v443 = vrot.slane %v157, 3
  %v444 = vrot.slane %v158, 3
  %vm445 = vcmp.lt.s32.totalorder %v23, 5
  %v446 = vsel %vm445, %v443, %v444
  %v447 = vsel %vm445, %v444, %v443
  %v448 = vsel %vm88, %v446, 0.0
  %v449 = vsel %vm89, %v447, 0.0
  %v450 = vadd.f32 %v309, %v448
  %v451 = vadd.f32 %v310, %v449
  %v452 = vsel %vm88, %v446, -inf
  %v453 = vsel %vm89, %v447, -inf
  %v454 = vmax.f32 %v313, %v452
  %v455 = vmax.f32 %v314, %v453
  %v456 = vrot.slane %v157, 5
  %v457 = vrot.slane %v158, 5
  %vm458 = vcmp.lt.s32.totalorder %v23, 3
  %v459 = vsel %vm458, %v456, %v457
  %v460 = vsel %vm458, %v457, %v456
  %v461 = vsel %vm43, %v460, 0.0
  %v462 = vsel %vm44, %v459, 0.0
  %v463 = vadd.f32 %v450, %v461
  %v464 = vadd.f32 %v451, %v462
  %v465 = vsel %vm43, %v460, -inf
  %v466 = vsel %vm44, %v459, -inf
  %v467 = vmax.f32 %v454, %v465
  %v468 = vmax.f32 %v455, %v466
  %469 = vrot.lane.b32.xlu0 %v463, 127
  %v470 = vpop.permute.xlu0 %469
  %471 = vrot.lane.b32.xlu0 %v464, 127
  %v472 = vpop.permute.xlu0 %471
  %v473 = vsel %vm74, %v470, 0.0
  %v474 = vsel %vm74, %v472, 0.0
  %v475 = vadd.f32 %v463, %v473
  %v476 = vadd.f32 %v464, %v474
  %477 = vrot.lane.b32.xlu0 %v467, 127
  %v478 = vpop.permute.xlu0 %477
  %479 = vrot.lane.b32.xlu0 %v468, 127
  %v480 = vpop.permute.xlu0 %479
  %v481 = vsel %vm74, %v478, -inf
  %v482 = vsel %vm74, %v480, -inf
  %v483 = vmax.f32 %v467, %v481
  %v484 = vmax.f32 %v468, %v482
  %485 = vrot.lane.b32.xlu0 %v463, 1
  %v486 = vpop.permute.xlu0 %485
  %487 = vrot.lane.b32.xlu0 %v464, 1
  %v488 = vpop.permute.xlu0 %487
  %v489 = vsel %vm65, %v486, 0.0
  %v490 = vsel %vm65, %v488, 0.0
  %v491 = vadd.f32 %v475, %v489
  %v492 = vadd.f32 %v476, %v490
  %493 = vrot.lane.b32.xlu0 %v467, 1
  %v494 = vpop.permute.xlu0 %493
  %495 = vrot.lane.b32.xlu0 %v468, 1
  %v496 = vpop.permute.xlu0 %495
  %v497 = vsel %vm65, %v494, -inf
  %v498 = vsel %vm65, %v496, -inf
  %v499 = vmax.f32 %v483, %v497
  %v500 = vmax.f32 %v484, %v498
  %501 = vrot.lane.b32.xlu0 %v463, 126
  %v502 = vpop.permute.xlu0 %501
  %503 = vrot.lane.b32.xlu0 %v464, 126
  %v504 = vpop.permute.xlu0 %503
  %v505 = vsel %vm83, %v502, 0.0
  %v506 = vsel %vm83, %v504, 0.0
  %v507 = vadd.f32 %v491, %v505
  %v508 = vadd.f32 %v492, %v506
  %509 = vrot.lane.b32.xlu0 %v467, 126
  %v510 = vpop.permute.xlu0 %509
  %511 = vrot.lane.b32.xlu0 %v468, 126
  %v512 = vpop.permute.xlu0 %511
  %v513 = vsel %vm83, %v510, -inf
  %v514 = vsel %vm83, %v512, -inf
  %v515 = vmax.f32 %v499, %v513
  %v516 = vmax.f32 %v500, %v514
  %517 = vrot.lane.b32.xlu0 %v463, 2
  %v518 = vpop.permute.xlu0 %517
  %519 = vrot.lane.b32.xlu0 %v464, 2
  %v520 = vpop.permute.xlu0 %519
  %v521 = vsel %vm56, %v518, 0.0
  %v522 = vsel %vm56, %v520, 0.0
  %v523 = vadd.f32 %v507, %v521
  %v524 = vadd.f32 %v508, %v522
  %525 = vrot.lane.b32.xlu0 %v467, 2
  %v526 = vpop.permute.xlu0 %525
  %527 = vrot.lane.b32.xlu0 %v468, 2
  %v528 = vpop.permute.xlu0 %527
  %v529 = vsel %vm56, %v526, -inf
  %v530 = vsel %vm56, %v528, -inf
  %v531 = vmax.f32 %v515, %v529
  %v532 = vmax.f32 %v516, %v530
  %533 = vrot.lane.b32.xlu0 %v463, 125
  %v534 = vpop.permute.xlu0 %533
  %535 = vrot.lane.b32.xlu0 %v464, 125
  %v536 = vpop.permute.xlu0 %535
  %v537 = vsel %vm92, %v534, 0.0
  %v538 = vsel %vm92, %v536, 0.0
  %v539 = vadd.f32 %v523, %v537
  %v540 = vadd.f32 %v524, %v538
  %541 = vrot.lane.b32.xlu0 %v467, 125
  %v542 = vpop.permute.xlu0 %541
  %543 = vrot.lane.b32.xlu0 %v468, 125
  %v544 = vpop.permute.xlu0 %543
  %v545 = vsel %vm92, %v542, -inf
  %v546 = vsel %vm92, %v544, -inf
  %v547 = vmax.f32 %v531, %v545
  %v548 = vmax.f32 %v532, %v546
  %549 = vrot.lane.b32.xlu0 %v463, 3
  %v550 = vpop.permute.xlu0 %549
  %551 = vrot.lane.b32.xlu0 %v464, 3
  %v552 = vpop.permute.xlu0 %551
  %v553 = vsel %vm47, %v550, 0.0
  %v554 = vsel %vm47, %v552, 0.0
  %v555 = vadd.f32 %v539, %v553
  %v556 = vadd.f32 %v540, %v554
  %557 = vrot.lane.b32.xlu0 %v467, 3
  %v558 = vpop.permute.xlu0 %557
  %559 = vrot.lane.b32.xlu0 %v468, 3
  %v560 = vpop.permute.xlu0 %559
  %v561 = vsel %vm47, %v558, -inf
  %v562 = vsel %vm47, %v560, -inf
  %v563 = vmax.f32 %v547, %v561
  %v564 = vmax.f32 %v548, %v562
  %v565 = vmul.f32 %v555, 0.020408163
  %v566 = vmul.f32 %v556, 0.020408163
  %v567 = vadd.f32 %v563, %v565
  %v568 = vadd.f32 %v564, %v566
  %s569 = scalar_lea.vmem %s3, 8
  %v570 = vld [vmem:[%s569] sm:$0x1]
  %v572 = vlaneseq
  %v573 = vshrl.u32 %v572, 7
  %v574 = vsub.s32 0, %v573
  %v575 = vrot.slane %v570, %v574
  %v577 = vmul.f32 %v567, %v575
  %v578 = vmul.f32 %v568, %v575
  %v579 = vadd.f32 %v441, %v577
  %v580 = vadd.f32 %v442, %v578
  %581 = vrot.lane.b32.xlu0 %v567, 96
  %v582 = vpop.permute.xlu0 %581
  %583 = vrot.lane.b32.xlu0 %v568, 96
  %v584 = vpop.permute.xlu0 %583
  %s585 = scalar_lea.vmem %s3, 9
  %v586 = vld [vmem:[%s585] sm:$0x1]
  %v588 = vlaneseq
  %v589 = vshrl.u32 %v588, 7
  %v590 = vsub.s32 0, %v589
  %v591 = vrot.slane %v586, %v590
  %v593 = vmul.f32 %v582, %v591
  %v594 = vmul.f32 %v584, %v591
  %v595 = vadd.f32 %v579, %v593
  %v596 = vadd.f32 %v580, %v594
  %597 = vrot.lane.b32.xlu0 %v567, 64
  %v598 = vpop.permute.xlu0 %597
  %599 = vrot.lane.b32.xlu0 %v568, 64
  %v600 = vpop.permute.xlu0 %599
  %s601 = scalar_lea.vmem %s3, 10
  %v602 = vld [vmem:[%s601] sm:$0x1]
  %v604 = vlaneseq
  %v605 = vshrl.u32 %v604, 7
  %v606 = vsub.s32 0, %v605
  %v607 = vrot.slane %v602, %v606
  %v609 = vmul.f32 %v598, %v607
  %v610 = vmul.f32 %v600, %v607
  %v611 = vadd.f32 %v595, %v609
  %v612 = vadd.f32 %v596, %v610
  %613 = vrot.lane.b32.xlu0 %v567, 32
  %v614 = vpop.permute.xlu0 %613
  %615 = vrot.lane.b32.xlu0 %v568, 32
  %v616 = vpop.permute.xlu0 %615
  %s617 = scalar_lea.vmem %s3, 11
  %v618 = vld [vmem:[%s617] sm:$0x1]
  %v620 = vlaneseq
  %v621 = vshrl.u32 %v620, 7
  %v622 = vsub.s32 0, %v621
  %v623 = vrot.slane %v618, %v622
  %v625 = vmul.f32 %v614, %v623
  %v626 = vmul.f32 %v616, %v623
  %v627 = vadd.f32 %v611, %v625
  %v628 = vadd.f32 %v612, %v626
  %629 = vst [vmem:[%s5] sm:$0xff] %v627
  %630 = vst [vmem:[%s5 + $0x8] sm:$0xff] %v628
  // Predicated region
  $region22: #{mrcb_forward.1} parent=0 // pred_check
    _
  $region23: #{mrcb_forward.1} parent=0 // pred_check_branch
    %632 = sbr.rel (0) target = $region25
  $region24: #{mrcb_forward.1} parent=0 // pred_region
    _
  $region25: #{mrcb_forward.1} parent=0 // pred_fallthru
    _
  // Predicated region
  $region26: #{mrcb_forward.1} parent=0 // pred_check
    _
  $region27: #{mrcb_forward.1} parent=0 // pred_check_branch
    %634 = sbr.rel (0) target = $region29
  $region28: #{mrcb_forward.1} parent=0 // pred_region
    _
  $region29: #{mrcb_forward.1} parent=0 // pred_fallthru
    _

</llo_original>
